<compile_context>
chip_gen: v6e
topology: v6e:2x2x1
jax: 0.10.0
libtpu: 0.0.40
codegen_flags: <defaults>
</compile_context>

<pallas_src>
import functools

import jax
import jax.numpy as jnp
from jax.experimental import pallas as pl
from jax.experimental.pallas import tpu as pltpu


def _make_learn_focal_kernel(H: int, W: int):
    """Builds a kernel with W, H folded in as float immediates."""
    w = float(W)
    h = float(H)

    def kernel(fx_ref, fy_ref, o_ref):
        # fx_ref: SMEM f32[1]; fy_ref: SMEM f32[1]; o_ref: SMEM f32[2]
        fx = fx_ref[0]
        fy = fy_ref[0]
        o_ref[0] = fx * fx * w
        o_ref[1] = fy * fy * h

    return kernel


def _learn_focal_pallas(fx, fy, H: int, W: int):
    """Raw pallas_call: fx, fy scalars (or (1,)) -> (2,) f32 [fx^2*W, fy^2*H]."""
    fx1 = jnp.atleast_1d(jnp.asarray(fx, jnp.float32))  # (1,), no-op if already (1,)
    fy1 = jnp.atleast_1d(jnp.asarray(fy, jnp.float32))
    return pl.pallas_call(
        _make_learn_focal_kernel(H, W),
        out_shape=jax.ShapeDtypeStruct((2,), jnp.float32),
        # Tiny scalar payload: keep everything on the SMEM scalar path,
        # full-array blocks, no grid, no VMEM/DMA.
        in_specs=[
            pl.BlockSpec(memory_space=pltpu.SMEM),
            pl.BlockSpec(memory_space=pltpu.SMEM),
        ],
        out_specs=pl.BlockSpec(memory_space=pltpu.SMEM),
        cost_estimate=pl.CostEstimate(flops=2, transcendentals=0, bytes_accessed=16),
    )(fx1, fy1)


# --- differentiable wrapper (fx, fy are trainable parameters in LearnFocal) ---
@functools.partial(jax.custom_vjp, nondiff_argnums=(2, 3))
def learn_focal_forward(fx, fy, H: int, W: int):
    """Returns fxfy = [fx**2 * W, fy**2 * H], shape (2,), float32."""
    return _learn_focal_pallas(fx, fy, H, W)


def _learn_focal_fwd(fx, fy, H, W):
    return _learn_focal_pallas(fx, fy, H, W), (fx, fy)


def _learn_focal_bwd(H, W, residuals, g):
    fx, fy = residuals
    dfx = (2.0 * jnp.asarray(fx, jnp.float32) * float(W) * g[0]).astype(
        jnp.result_type(fx)).reshape(jnp.shape(fx))
    dfy = (2.0 * jnp.asarray(fy, jnp.float32) * float(H) * g[1]).astype(
        jnp.result_type(fy)).reshape(jnp.shape(fy))
    return (dfx, dfy)


learn_focal_forward.defvjp(_learn_focal_fwd, _learn_focal_bwd)


@functools.partial(jax.jit, static_argnames=("H", "W"))
def learn_focal(fx, fy, H: int, W: int):
    return learn_focal_forward(fx, fy, H, W)


if __name__ == "__main__":
    # Small, module-consistent "image" dimensions.
    H, W = 16, 16

    # Deterministic parameter init. The PyTorch module initializes fx=fy=1.0;
    # perturb slightly with PRNGKey(0) so the squaring is exercised.
    key = jax.random.PRNGKey(0)
    kfx, kfy = jax.random.split(key)
    fx = jnp.float32(1.0) + 0.1 * jax.random.normal(kfx, (), dtype=jnp.float32)
    fy = jnp.float32(1.0) + 0.1 * jax.random.normal(kfy, (), dtype=jnp.float32)

    fxfy = jax.block_until_ready(learn_focal(fx, fy, H, W))

    # Pure-JAX reference check of the PyTorch semantics.
    ref = jnp.stack([fx ** 2 * W, fy ** 2 * H]).astype(jnp.float32)
    assert fxfy.shape == (2,) and fxfy.dtype == jnp.float32
    assert jnp.allclose(fxfy, ref, rtol=1e-6, atol=1e-6)

    # Gradient check through the custom VJP (fx, fy are learned parameters).
    gfx, gfy = jax.grad(
        lambda a, b: jnp.sum(learn_focal_forward(a, b, H, W)), argnums=(0, 1)
    )(fx, fy)
    assert jnp.allclose(gfx, 2.0 * fx * W, rtol=1e-6, atol=1e-6)
    assert jnp.allclose(gfy, 2.0 * fy * H, rtol=1e-6, atol=1e-6)

    print("KERNEL_OK")
</pallas_src>

<mosaic_0001>
module attributes {stable_mosaic.version = 11 : i64} {
  func.func @kernel(%arg0: memref<1xf32, #tpu.memory_space<smem>>, %arg1: memref<1xf32, #tpu.memory_space<smem>>, %arg2: memref<2xf32, #tpu.memory_space<smem>>) attributes {dimension_semantics = [], scalar_prefetch = 0 : i64, scratch_operands = 0 : i64, tpu.core_type = #tpu.core_type<tc>} {
    %c0 = arith.constant 0 : index
    %0 = memref.load %arg0[%c0] : memref<1xf32, #tpu.memory_space<smem>>
    %c0_0 = arith.constant 0 : index
    %1 = memref.load %arg1[%c0_0] : memref<1xf32, #tpu.memory_space<smem>>
    %2 = arith.mulf %0, %0 : f32
    %cst = arith.constant 1.600000e+01 : f32
    %3 = arith.mulf %2, %cst : f32
    %c0_1 = arith.constant 0 : index
    %4 = memref.load %arg2[%c0_1] : memref<2xf32, #tpu.memory_space<smem>>
    memref.store %3, %arg2[%c0_1] : memref<2xf32, #tpu.memory_space<smem>>
    %5 = arith.mulf %1, %1 : f32
    %cst_2 = arith.constant 1.600000e+01 : f32
    %6 = arith.mulf %5, %cst_2 : f32
    %c1 = arith.constant 1 : index
    %7 = memref.load %arg2[%c1] : memref<2xf32, #tpu.memory_space<smem>>
    memref.store %6, %arg2[%c1] : memref<2xf32, #tpu.memory_space<smem>>
    return
  }
}

</mosaic_0001>

<llo_original>
// kernel: learn_focal.1
$region0: #{learn_focal.1}
  #allocation0 [shape = 'u32[]', space=smem, size = 0x4, offset = 0x4, fixed_abs, tag = 'smem constant byte address 0x4 - core index']
  #allocation1 [shape = 'u32[144,128]{1,0:T(1,128)}', space=vmem, size = 0x12000, scoped, tag = 'internal scratch']
  #allocation2 [shape = 'f32[1]{0:T(128)S(6)}', space=smem, size = 0x200, scoped, tag = 'scoped memory for learn_focal.1']
  #allocation3 [shape = 'f32[1]{0:T(128)S(6)}', space=smem, size = 0x200, scoped, tag = 'scoped memory for learn_focal.1']
  %s0 = inlined_call_operand.<no memory space> [shape: f32[1], index: 0, kind: input, shape index: {}]
  %s1 = inlined_call_operand.<no memory space> [shape: f32[1], index: 1, kind: input, shape index: {}]
  %s2 = inlined_call_operand.hbm [shape: f32[2], index: 2, kind: output, shape index: {}]
  %s3 = sld [smem:[#allocation0]]
  $region18: #{learn_focal.1} parent=0
    _
  %s5 = ssub.s32 1, %s3
  %s6 = scalar_select 0, %s5, %s3
  %7 = sst [smem:[#allocation2]] %s0
  %8 = sst [smem:[#allocation3]] %s1
  $region1: #{learn_focal.1} parent=0
    #allocation4 [shape = 'u8[512]{0}', space=smem, size = 0x200, scoped, tag = 'output window, operand 0, single buffered']
    #allocation5 [shape = 's32[1]{0}', space=sflag, size = 0x4, scoped, tag = 'scoped memory for learn_focal.1']
    %9 = vsyncpa [#allocation5], 0
    // Predicated region
    $region2: #{learn_focal.1} parent=1 // pred_check
      _
    $region3: #{learn_focal.1} parent=1 // pred_check_branch
      %11 = sbr.rel (0) target = $region5
    $region4: #{learn_focal.1} parent=1 // pred_region
      _
    $region5: #{learn_focal.1} parent=1 // pred_fallthru
      _
    // Predicated region
    $region6: #{learn_focal.1} parent=1 // pred_check
      _
    $region7: #{learn_focal.1} parent=1 // pred_check_branch
      %13 = sbr.rel (0) target = $region9
    $region8: #{learn_focal.1} parent=1 // pred_region
      _
    $region9: #{learn_focal.1} parent=1 // pred_fallthru
      _
    %s14 = sld [smem:[#allocation2]]
    %s15 = sld [smem:[#allocation3]]
    %s16 = smul.f32 %s14, %s14
    %s17 = smul.f32 %s16, 16.0
    %s18 = scalar_lea.smem [#allocation4], 0
    %19 = sst [smem:[%s18]] %s17
    %s20 = smul.f32 %s15, %s15
    %s21 = smul.f32 %s20, 16.0
    %s22 = scalar_lea.smem [#allocation4], 1
    %23 = sst [smem:[%s22]] %s21
    // Predicated region
    $region10: #{learn_focal.1} parent=1 // pred_check
      _
    $region11: #{learn_focal.1} parent=1 // pred_check_branch
      %25 = sbr.rel (0) target = $region13
    $region12: #{learn_focal.1} parent=1 // pred_region
      %s27 = ssub.s32 16, 16
      %28 = vsyncadd [#allocation5], %s27
      %31 = dma.smem_to_hbm [#allocation4], 16, %s2, [#allocation5]
    $region13: #{learn_focal.1} parent=1 // pred_fallthru
      _
    // Predicated region
    $region14: #{learn_focal.1} parent=1 // pred_check
      _
    $region15: #{learn_focal.1} parent=1 // pred_check_branch
      %33 = sbr.rel (0) target = $region17
    $region16: #{learn_focal.1} parent=1 // pred_region
      %34 = dma.done [#allocation5], 16
    $region17: #{learn_focal.1} parent=1 // pred_fallthru
      _
    %35 = sfence
    %36 = vsyncpa [#allocation5], 1

</llo_original>
